<compile_context>
chip_gen: v7x
topology: tpu7x:2x2x1
jax: 0.10.0
libtpu: 0.0.40
codegen_flags: <defaults>
</compile_context>

<pallas_src>
import jax
import jax.numpy as jnp
from jax.experimental import pallas as pl
from jax.experimental.pallas import tpu as pltpu


# ----------------------------- Pallas kernel ------------------------------ #

def btcn_kernel(w_ref, x_ref, o_ref):
    """Fused bidirectional gated temporal conv, one lane tile per grid step.

    w_ref : (6F, KN+1)  fused weight rows [c1f|c2f|c3f|c1b|c2b|c3b]; backward
                        taps already K-flipped, bias folded into last column
    x_ref : (KN+1, TL)  im2col'd input columns (+ ones row); lane axis = (b, l)
    o_ref : (2F, TL)    rows 0:F  = forward gated output
                        rows F:2F = backward gated output (still time-reversed;
                        the wrapper un-reverses it)
    """
    F = w_ref.shape[0] // 6

    # Single MXU push: all six convs + bias in one (6F, KN+1) x (KN+1, TL).
    acc = jnp.dot(w_ref[...], x_ref[...],
                  preferred_element_type=jnp.float32)            # (6F, TL)

    # Gated combination per stream: conv1 * sigmoid(conv2) + conv3.
    o_ref[0 * F:1 * F, :] = (acc[0 * F:1 * F] * jax.nn.sigmoid(acc[1 * F:2 * F])
                             + acc[2 * F:3 * F])
    o_ref[1 * F:2 * F, :] = (acc[3 * F:4 * F] * jax.nn.sigmoid(acc[4 * F:5 * F])
                             + acc[5 * F:6 * F])


# ------------------------------ JAX wrapper -------------------------------- #

def b_tcn_forward(X, params, kernel_size=3, activation='relu'):
    """Matches B_TCN.forward(X) for X of shape (B, T, N)."""
    B, T, N = X.shape
    F = params['w1'].shape[2]
    K = kernel_size
    L = T - K + 1
    KN1 = K * N + 1
    F6 = 6 * F

    # --- wrapper-side im2col: lane axis = (batch, time); contraction = (k, n).
    cols = jnp.stack([X[:, k:k + L, :] for k in range(K)], axis=0)   # (K,B,L,N)
    xcol = jnp.transpose(cols, (0, 3, 1, 2)).reshape(K * N, B * L)   # (KN, B*L)

    total = B * L
    lane_tile = min(512, pl.cdiv(total, 128) * 128)     # multiple of 128
    total_pad = pl.cdiv(total, lane_tile) * lane_tile
    xcol = jnp.pad(xcol, ((0, 0), (0, total_pad - total)))
    xcol = jnp.concatenate(
        [xcol, jnp.ones((1, total_pad), jnp.float32)], axis=0)       # (KN+1,Tp)

    # --- fuse the six conv weights (backward taps K-flipped) + bias column.
    def flat(w):                                      # (K, N, F) -> (F, K*N)
        return jnp.transpose(w, (2, 0, 1)).reshape(F, K * N)
    w_rows = jnp.concatenate(
        [flat(params['w1']), flat(params['w2']), flat(params['w3']),
         flat(params['w1b'][::-1]), flat(params['w2b'][::-1]),
         flat(params['w3b'][::-1])], axis=0)                          # (6F, KN)
    b_col = jnp.concatenate(
        [params['b1'], params['b2'], params['b3'],
         params['b1b'], params['b2b'], params['b3b']],
        axis=1).reshape(F6, 1)                                        # (6F, 1)
    w_fused = jnp.concatenate([w_rows, b_col], axis=1)                # (6F,KN+1)

    grid = (total_pad // lane_tile,)
    cost = pl.CostEstimate(
        flops=2 * F6 * KN1 * total_pad + 4 * F * total_pad,
        transcendentals=2 * F * total_pad,
        bytes_accessed=4 * (KN1 * total_pad + F6 * KN1 + 2 * F * total_pad))

    out = pl.pallas_call(
        btcn_kernel,
        grid=grid,
        out_shape=jax.ShapeDtypeStruct((2 * F, total_pad), jnp.float32),
        in_specs=[pl.BlockSpec((F6, KN1), lambda j: (0, 0)),          # resident
                  pl.BlockSpec((KN1, lane_tile), lambda j: (0, j))],
        out_specs=pl.BlockSpec((2 * F, lane_tile), lambda j: (0, j)),
        compiler_params=pltpu.CompilerParams(
            dimension_semantics=("parallel",),        # independent lane tiles
            vmem_limit_bytes=32 * 1024 * 1024),
        cost_estimate=cost,
    )(w_fused, xcol)

    # --- epilogue stays in XLA (tiny vs. the conv): un-flatten the lane axis,
    # undo the backward-stream time reversal BEFORE the quirky PyTorch
    # (B, F, 1, L).reshape(B, L, F) axis-mixing reshape, pad, reverse, act, add.
    # TODO(synk): fold this epilogue into the kernel only if it ever shows up
    # in profiles; it would require an arbitrary (F, L)->(L, F) reshuffle in
    # Mosaic plus masked (non-lane-dense) stores.
    of = out[0:F, :total].reshape(F, B, L).transpose(1, 0, 2)         # (B, F, L)
    ob = out[F:2 * F, :total].reshape(F, B, L).transpose(1, 0, 2)[:, :, ::-1]
    outf = of.reshape(B, L, F)
    outb = ob.reshape(B, L, F)
    rec = jnp.zeros((B, K - 1, F), jnp.float32)
    outf = jnp.concatenate([outf, rec], axis=1)                       # (B, T, F)
    outb = jnp.concatenate([outb, rec], axis=1)[:, ::-1, :]           # (B, T, F)
    if activation == 'relu':
        return jax.nn.relu(outf) + jax.nn.relu(outb)
    elif activation == 'sigmoid':
        return jax.nn.sigmoid(outf) + jax.nn.sigmoid(outb)
    return outf + outb


# -------------------------- pure-JAX reference ----------------------------- #

def b_tcn_reference(X, params, kernel_size=3, activation='relu'):
    B, T, N = X.shape
    F_out = params['w1'].shape[2]
    K = kernel_size
    L = T - K + 1

    def gated(x, w1, w2, w3, b1, b2, b3):
        def conv(w, b):
            acc = jnp.zeros((B, L, F_out), jnp.float32)
            for k in range(K):
                acc = acc + jnp.einsum('bln,nf->blf', x[:, k:k + L, :], w[k])
            return acc + b[None, :, :]
        return conv(w1, b1) * jax.nn.sigmoid(conv(w2, b2)) + conv(w3, b3)

    Xb = X[:, ::-1, :]
    outf_c = gated(X, params['w1'], params['w2'], params['w3'],
                   params['b1'], params['b2'], params['b3'])
    outb_c = gated(Xb, params['w1b'], params['w2b'], params['w3b'],
                   params['b1b'], params['b2b'], params['b3b'])
    outf = jnp.transpose(outf_c, (0, 2, 1)).reshape(B, L, F_out)
    outb = jnp.transpose(outb_c, (0, 2, 1)).reshape(B, L, F_out)
    rec = jnp.zeros((B, K - 1, F_out), jnp.float32)
    outf = jnp.concatenate([outf, rec], axis=1)
    outb = jnp.concatenate([outb, rec], axis=1)[:, ::-1, :]
    if activation == 'relu':
        return jax.nn.relu(outf) + jax.nn.relu(outb)
    elif activation == 'sigmoid':
        return jax.nn.sigmoid(outf) + jax.nn.sigmoid(outb)
    return outf + outb


# --------------------------- parameter init -------------------------------- #

def init_params(key, in_channels, out_channels, kernel_size):
    """Deterministic init matching Conv2d default U(-1/sqrt(fan_in), +...)."""
    fan_in = in_channels * kernel_size
    bound = 1.0 / (fan_in ** 0.5)
    names = ['1', '2', '3', '1b', '2b', '3b']
    keys = jax.random.split(key, 2 * len(names))
    params = {}
    for i, n in enumerate(names):
        params['w' + n] = jax.random.uniform(
            keys[2 * i], (kernel_size, in_channels, out_channels),
            jnp.float32, -bound, bound)
        params['b' + n] = jax.random.uniform(
            keys[2 * i + 1], (1, out_channels), jnp.float32, -bound, bound)
    return params


# --------------------------------- main ------------------------------------ #

if __name__ == "__main__":
    B, T, N = 2, 16, 4          # batch, num_timesteps, num_nodes (= in_channels)
    F_out, K = 8, 3             # out_channels, kernel_size

    key = jax.random.PRNGKey(0)
    kx, kp = jax.random.split(key)
    X = jax.random.normal(kx, (B, T, N), jnp.float32)
    params = init_params(kp, N, F_out, K)

    fwd = jax.jit(lambda x, p: b_tcn_forward(x, p, kernel_size=K,
                                             activation='relu'))
    out = jax.block_until_ready(fwd(X, params))

    ref = b_tcn_reference(X, params, kernel_size=K, activation='relu')
    assert out.shape == (B, T, F_out), out.shape
    max_err = float(jnp.max(jnp.abs(out - ref)))
    assert jnp.allclose(out, ref, atol=1e-4, rtol=1e-4), max_err

    print("KERNEL_OK")
</pallas_src>

<mosaic_0001>
module attributes {stable_mosaic.version = 11 : i64} {
  func.func @btcn_kernel(%arg0: i32, %arg1: memref<48x13xf32, #tpu.memory_space<vmem>>, %arg2: memref<13x128xf32, #tpu.memory_space<vmem>>, %arg3: memref<16x128xf32, #tpu.memory_space<vmem>>) attributes {dimension_semantics = [#tpu.dimension_semantics<parallel>], iteration_bounds = array<i64: 1>, scalar_prefetch = 0 : i64, scratch_operands = 0 : i64, tpu.core_type = #tpu.core_type<tc>, window_params = [{pipeline_mode = #tpu.pipeline_mode<synchronous>, transform_indices = @transform_0, window_bounds = array<i64: 48, 13>}, {transform_indices = @transform_1, window_bounds = array<i64: 13, 128>}, {transform_indices = @transform_2, window_bounds = array<i64: 16, 128>}]} {
    %c0 = arith.constant 0 : index
    %c0_0 = arith.constant 0 : index
    %0 = vector.load %arg1[%c0, %c0_0] : memref<48x13xf32, #tpu.memory_space<vmem>>, vector<48x13xf32>
    %c0_1 = arith.constant 0 : index
    %c0_2 = arith.constant 0 : index
    %1 = vector.load %arg2[%c0_1, %c0_2] : memref<13x128xf32, #tpu.memory_space<vmem>>, vector<13x128xf32>
    %cst = arith.constant dense<0.000000e+00> : vector<48x128xf32>
    %2 = tpu.matmul %0, %1, %cst {dimension_numbers = #tpu.dot_dimension_numbers<[1], [0], [0], [1], [0, 0, 1, 1], [], []>} : vector<48x13xf32>, vector<13x128xf32>, vector<48x128xf32> -> vector<48x128xf32>
    %3 = vector.extract_strided_slice %2 {offsets = [0, 0], sizes = [8, 128], strides = [1, 1]} : vector<48x128xf32> to vector<8x128xf32>
    %4 = vector.extract_strided_slice %2 {offsets = [8, 0], sizes = [8, 128], strides = [1, 1]} : vector<48x128xf32> to vector<8x128xf32>
    %5 = arith.negf %4 : vector<8x128xf32>
    %6 = math.exp %5 : vector<8x128xf32>
    %cst_3 = arith.constant 1.000000e+00 : f32
    %7 = vector.broadcast %cst_3 : f32 to vector<8x128xf32>
    %8 = arith.addf %7, %6 : vector<8x128xf32>
    %9 = arith.divf %7, %8 : vector<8x128xf32>
    %10 = arith.mulf %3, %9 : vector<8x128xf32>
    %11 = vector.extract_strided_slice %2 {offsets = [16, 0], sizes = [8, 128], strides = [1, 1]} : vector<48x128xf32> to vector<8x128xf32>
    %12 = arith.addf %10, %11 : vector<8x128xf32>
    %c0_4 = arith.constant 0 : index
    %c0_5 = arith.constant 0 : index
    %13 = vector.load %arg3[%c0_4, %c0_5] : memref<16x128xf32, #tpu.memory_space<vmem>>, vector<8x128xf32>
    tpu.vector_store %arg3[%c0_4, %c0_5], %12 {strides = array<i32>} : memref<16x128xf32, #tpu.memory_space<vmem>>, vector<8x128xf32>,
    %14 = vector.extract_strided_slice %2 {offsets = [24, 0], sizes = [8, 128], strides = [1, 1]} : vector<48x128xf32> to vector<8x128xf32>
    %15 = vector.extract_strided_slice %2 {offsets = [32, 0], sizes = [8, 128], strides = [1, 1]} : vector<48x128xf32> to vector<8x128xf32>
    %16 = arith.negf %15 : vector<8x128xf32>
    %17 = math.exp %16 : vector<8x128xf32>
    %cst_6 = arith.constant 1.000000e+00 : f32
    %18 = vector.broadcast %cst_6 : f32 to vector<8x128xf32>
    %19 = arith.addf %18, %17 : vector<8x128xf32>
    %20 = arith.divf %18, %19 : vector<8x128xf32>
    %21 = arith.mulf %14, %20 : vector<8x128xf32>
    %22 = vector.extract_strided_slice %2 {offsets = [40, 0], sizes = [8, 128], strides = [1, 1]} : vector<48x128xf32> to vector<8x128xf32>
    %23 = arith.addf %21, %22 : vector<8x128xf32>
    %c8 = arith.constant 8 : index
    %c0_7 = arith.constant 0 : index
    %24 = vector.load %arg3[%c8, %c0_7] : memref<16x128xf32, #tpu.memory_space<vmem>>, vector<8x128xf32>
    tpu.vector_store %arg3[%c8, %c0_7], %23 {strides = array<i32>} : memref<16x128xf32, #tpu.memory_space<vmem>>, vector<8x128xf32>,
    return
  }
  func.func @transform_0(%arg0: i32) -> (i32, i32) {
    %c0_i32 = arith.constant 0 : i32
    %c0_i32_0 = arith.constant 0 : i32
    %c0_i32_1 = arith.constant 0 : i32
    return %c0_i32, %c0_i32_0 : i32, i32
  }
  func.func @transform_1(%arg0: i32) -> (i32, i32) {
    %c0_i32 = arith.constant 0 : i32
    %c0_i32_0 = arith.constant 0 : i32
    return %c0_i32, %arg0 : i32, i32
  }
  func.func @transform_2(%arg0: i32) -> (i32, i32) {
    %c0_i32 = arith.constant 0 : i32
    %c0_i32_0 = arith.constant 0 : i32
    return %c0_i32, %arg0 : i32, i32
  }
}

</mosaic_0001>

<llo_original>
// kernel: _lambda_.1
$region0: #{_lambda_.1}
  #allocation0 [shape = 'u32[]', space=smem, size = 0x4, offset = 0x4, fixed_abs, tag = 'smem constant byte address 0x4 - core index']
  #allocation1 [shape = 'u32[144,128]{1,0:T(1,128)}', space=vmem, size = 0x12000, scoped, tag = 'internal scratch']
  %s0 = inlined_call_operand.vmem [shape: f32[48,13], index: 0, kind: input, shape index: {}]
  %s1 = inlined_call_operand.vmem [shape: f32[13,128], index: 1, kind: input, shape index: {}]
  %s2 = inlined_call_operand.vmem [shape: f32[16,128], index: 2, kind: output, shape index: {}]
  %s3 = sld [smem:[#allocation0]]
  $region18: #{_lambda_.1} parent=0
    _
  %s5 = ssub.s32 1, %s3
  %s6 = scalar_select 0, %s5, %s3
  // Predicated region
  $region2: #{_lambda_.1} parent=0 // pred_check
    _
  $region3: #{_lambda_.1} parent=0 // pred_check_branch
    %8 = sbr.rel (0) target = $region5
  $region4: #{_lambda_.1} parent=0 // pred_region
    _
  $region5: #{_lambda_.1} parent=0 // pred_fallthru
    _
  // Predicated region
  $region6: #{_lambda_.1} parent=0 // pred_check
    _
  $region7: #{_lambda_.1} parent=0 // pred_check_branch
    %10 = sbr.rel (0) target = $region9
  $region8: #{_lambda_.1} parent=0 // pred_region
    _
  $region9: #{_lambda_.1} parent=0 // pred_fallthru
    _
  %v11 = vld [vmem:[%s0] sm:$0xff]
  %v12 = vld [vmem:[%s0 + $0x8] sm:$0xff]
  %v13 = vld [vmem:[%s0 + $0x10] sm:$0xff]
  %v14 = vld [vmem:[%s0 + $0x18] sm:$0xff]
  %v15 = vld [vmem:[%s0 + $0x20] sm:$0xff]
  %v16 = vld [vmem:[%s0 + $0x28] sm:$0xff]
  %v17 = vld [vmem:[%s1] sm:$0xff]
  %v18 = vld [vmem:[%s1 + $0x8] sm:$0x1f]
  %vm19 = vcmask 105472
  %v21 = vsel %vm19, %v11, 0
  %v24 = vsel %vm19, %v12, 0
  %v27 = vsel %vm19, %v13, 0
  %v30 = vsel %vm19, %v14, 0
  %v33 = vsel %vm19, %v15, 0
  %v36 = vsel %vm19, %v16, 0
  %vm38 = vcmask 1044480
  %v40 = vsel %vm38, %v18, 0
  %42 = vmatprep.subr.mxu0 0.0
  %43 = vmatpush1.msra.mxu0 %v17
  %44 = vmatprep.subr.mxu0 0.0
  %45 = vmatpush1.msra.mxu0 %v40
  %46 = vmatprep.subr.mxu0 0.0
  %47 = vmatpush1.msra.mxu0 0.0
  %48 = vmatprep.subr.mxu0 0.0
  %49 = vmatpush1.msra.mxu0 0.0
  %50 = vmatprep.subr.mxu0 0.0
  %51 = vmatpush1.msra.mxu0 0.0
  %52 = vmatprep.subr.mxu0 0.0
  %53 = vmatpush1.msra.mxu0 0.0
  %54 = vmatprep.subr.mxu0 0.0
  %55 = vmatpush1.msra.mxu0 0.0
  %56 = vmatprep.subr.mxu0 0.0
  %57 = vmatpush1.msra.mxu0 0.0
  %58 = vmatprep.subr.mxu0 0.0
  %59 = vmatpush1.msra.mxu0 0.0
  %60 = vmatprep.subr.mxu0 0.0
  %61 = vmatpush1.msra.mxu0 0.0
  %62 = vmatprep.subr.mxu0 0.0
  %63 = vmatpush1.msra.mxu0 0.0
  %64 = vmatprep.subr.mxu0 0.0
  %65 = vmatpush1.msra.mxu0 0.0
  %66 = vmatprep.subr.mxu0 0.0
  %67 = vmatpush1.msra.mxu0 0.0
  %68 = vmatprep.subr.mxu0 0.0
  %69 = vmatpush1.msra.mxu0 0.0
  %70 = vmatprep.subr.mxu0 0.0
  %71 = vmatpush1.msra.mxu0 0.0
  %72 = vmatprep.subr.mxu0 0.0
  %73 = vmatpush1.msra.mxu0 0.0
  %74 = vmatprep.subr.mxu0 0.0
  %75 = vmatpush1.msra.mxu0 0.0
  %76 = vmatprep.subr.mxu0 0.0
  %77 = vmatpush1.msra.mxu0 0.0
  %78 = vmatprep.subr.mxu0 0.0
  %79 = vmatpush1.msra.mxu0 0.0
  %80 = vmatprep.subr.mxu0 0.0
  %81 = vmatpush1.msra.mxu0 0.0
  %82 = vmatprep.subr.mxu0 0.0
  %83 = vmatpush1.msra.mxu0 0.0
  %84 = vmatprep.subr.mxu0 0.0
  %85 = vmatpush1.msra.mxu0 0.0
  %86 = vmatprep.subr.mxu0 0.0
  %87 = vmatpush1.msra.mxu0 0.0
  %88 = vmatprep.subr.mxu0 0.0
  %89 = vmatpush1.msra.mxu0 0.0
  %90 = vmatprep.subr.mxu0 0.0
  %91 = vmatpush1.msra.mxu0 0.0
  %92 = vmatprep.subr.mxu0 0.0
  %93 = vmatpush1.msra.mxu0 0.0
  %94 = vmatprep.subr.mxu0 0.0
  %95 = vmatpush1.msra.mxu0 0.0
  %96 = vmatprep.subr.mxu0 0.0
  %97 = vmatpush1.msra.mxu0 0.0
  %98 = vmatprep.subr.mxu0 0.0
  %99 = vmatpush1.msra.mxu0 0.0
  %100 = vmatprep.subr.mxu0 0.0
  %101 = vmatpush1.msra.mxu0 0.0
  %102 = vmatprep.subr.mxu0 0.0
  %103 = vmatpush1.msra.mxu0 0.0
  %104 = vmatprep.subr.mxu0 0.0
  %105 = vmatpush1.msra.mxu0 0.0
  %106 = vmatprep.mubr.f32.mxu0 0.0
  %107 = vmatmul.mubr.f32.gmra.mrb[0].mxu0 %v21
  %v108 = vpop.f32.mrb[0].mxu0
  %v109 = vadd.f32 0.0, %v108
  %v110 = vpop.f32.mrb[0].mxu0
  %111 = vmatprep.mubr.f32.mxu0 0.0
  %112 = vmatmul.mubr.f32.gmra.mrb[0].mxu0 %v24
  %v113 = vpop.f32.mrb[0].mxu0
  %v114 = vadd.f32 0.0, %v113
  %v115 = vpop.f32.mrb[0].mxu0
  %116 = vmatprep.mubr.f32.mxu0 0.0
  %117 = vmatmul.mubr.f32.gmra.mrb[0].mxu0 %v27
  %v118 = vpop.f32.mrb[0].mxu0
  %v119 = vadd.f32 0.0, %v118
  %v120 = vpop.f32.mrb[0].mxu0
  %121 = vmatprep.mubr.f32.mxu0 0.0
  %122 = vmatmul.mubr.f32.gmra.mrb[0].mxu0 %v30
  %v123 = vpop.f32.mrb[0].mxu0
  %v124 = vadd.f32 0.0, %v123
  %v125 = vpop.f32.mrb[0].mxu0
  %126 = vmatprep.mubr.f32.mxu0 0.0
  %127 = vmatmul.mubr.f32.gmra.mrb[0].mxu0 %v33
  %v128 = vpop.f32.mrb[0].mxu0
  %v129 = vadd.f32 0.0, %v128
  %v130 = vpop.f32.mrb[0].mxu0
  %131 = vmatprep.mubr.f32.mxu0 0.0
  %132 = vmatmul.mubr.f32.gmra.mrb[0].mxu0 %v36
  %v133 = vpop.f32.mrb[0].mxu0
  %v134 = vadd.f32 0.0, %v133
  %v135 = vpop.f32.mrb[0].mxu0
  %136 = vdwg.mxu0
  %v137 = vxor.u32 %v114, 2147483648
  %v138 = vmul.f32 %v137, 1.442695
  %v139 = vpow.pop %v138
  %v140 = vadd.f32 %v139, 1.0
  %v141 = vrcp.pop %v140
  %v142 = vmul.f32 1.0, %v141
  %v143 = vmul.f32 %v109, %v142
  %v144 = vadd.f32 %v143, %v119
  %145 = vst [vmem:[%s2] sm:$0xff] %v144
  %v146 = vxor.u32 %v129, 2147483648
  %v147 = vmul.f32 %v146, 1.442695
  %v148 = vpow.pop %v147
  %v149 = vadd.f32 %v148, 1.0
  %v150 = vrcp.pop %v149
  %v151 = vmul.f32 1.0, %v150
  %v152 = vmul.f32 %v124, %v151
  %v153 = vadd.f32 %v152, %v134
  %154 = vst [vmem:[%s2 + $0x8] sm:$0xff] %v153
  // Predicated region
  $region10: #{_lambda_.1} parent=0 // pred_check
    _
  $region11: #{_lambda_.1} parent=0 // pred_check_branch
    %156 = sbr.rel (0) target = $region13
  $region12: #{_lambda_.1} parent=0 // pred_region
    _
  $region13: #{_lambda_.1} parent=0 // pred_fallthru
    _
  // Predicated region
  $region14: #{_lambda_.1} parent=0 // pred_check
    _
  $region15: #{_lambda_.1} parent=0 // pred_check_branch
    %158 = sbr.rel (0) target = $region17
  $region16: #{_lambda_.1} parent=0 // pred_region
    _
  $region17: #{_lambda_.1} parent=0 // pred_fallthru
    _

</llo_original>
